<compile_context>
chip_gen: v7x
topology: tpu7x:2x2x1
jax: 0.10.0
libtpu: 0.0.40
codegen_flags: <defaults>
</compile_context>

<pallas_src>
import functools

import jax
import jax.numpy as jnp
from jax.experimental import pallas as pl
from jax.experimental.pallas import tpu as pltpu


# --------------------------------------------------------------------------
# Kernels
# --------------------------------------------------------------------------
def _packed_kernel(x_ref, w_ref, b_ref, o_ref):
    # x_ref: (tb, 128)   f32 VMEM - k=128//N original rows packed per row.
    # w_ref: (128, k)    f32 VMEM - block-diagonal weight, resident.
    # b_ref: (1,)        f32 SMEM scalar.
    # o_ref: (tb, k)     f32 VMEM - o[i, c] = y[i*k + c].
    y = jnp.dot(x_ref[...], w_ref[...], preferred_element_type=jnp.float32)
    o_ref[...] = (y + b_ref[0]).astype(o_ref.dtype)


def _gemv_kernel(x_ref, w_ref, b_ref, o_ref, acc_ref):
    # General path: VPU multiply + lane reduce, K-tiled with an accumulator.
    # x_ref: (tb, tn) f32; w_ref: (1, tn) f32; b_ref: (1,) SMEM; o_ref: (tb,1).
    j = pl.program_id(1)

    @pl.when(j == 0)
    def _():
        acc_ref[...] = jnp.zeros_like(acc_ref)

    acc_ref[...] += jnp.sum(x_ref[...] * w_ref[...], axis=-1, keepdims=True)

    @pl.when(j == pl.num_programs(1) - 1)
    def _():
        o_ref[...] = (acc_ref[...] + b_ref[0]).astype(o_ref.dtype)


# --------------------------------------------------------------------------
# Tiling helpers (layout-aware VMEM accounting)
# --------------------------------------------------------------------------
def _lane_pad(n):
    """Width of one row in VMEM lanes (last dim pads to a multiple of 128)."""
    return -(-n // 128) * 128


def _vmem_budget_bytes():
    """Total VMEM allowed for batch-scaled buffers (x/out double-buffered +
    accumulator), per generation.  Stays under the scoped-VMEM defaults
    (16 MiB on v5e, 32 MiB on v6e/v7x) with headroom."""
    try:
        kind = jax.devices()[0].device_kind.lower()
    except Exception:  # pragma: no cover - defensive
        kind = ""
    if "v6" in kind or "v7" in kind:
        return 16 << 20
    return 8 << 20


def _choose_feature_tile(n, budget):
    """Full N unless even a minimal 8-row, double-buffered block would blow
    the budget; then tile N in multiples of 128."""
    if 2 * 8 * _lane_pad(n) * 4 <= budget:
        return n
    return max(128, (budget // (2 * 8 * 4)) // 128 * 128)


def _choose_batch_tile(batch, per_row_bytes, budget):
    """per_row_bytes: lane-padded VMEM bytes per batch row summed over every
    batch-scaled buffer (x x2 buffers, out x2 buffers, accumulator)."""
    tb = max(8, (budget // per_row_bytes) // 8 * 8)
    # Keep >= 4 grid steps on the batch axis when possible
    # (>= 2 steps per TensorCore under v7x megacore sharding).
    q = -(-batch // 4)
    q = -(-q // 8) * 8
    return min(tb, max(8, q))


# --------------------------------------------------------------------------
# Forward paths
# --------------------------------------------------------------------------
def _forward_packed(x, weight, bias, budget):
    """Small-N lane-dense path: pack k = 128//N rows per 128-lane row and do a
    block-diagonal (tb,128)@(128,k) matmul per block."""
    B, N = x.shape
    k = 128 // N
    Bp = B // k
    xp = x.reshape(Bp, k * N)  # free row-major reshape, no HBM movement

    # Block-diagonal weight (k*N, k): column c carries W for packed group c.
    eye = jnp.eye(k, dtype=x.dtype)
    w_bd = (eye[:, None, :] * weight.reshape(1, N, 1)).reshape(k * N, k)

    # Per batch row: x 128 lanes x2 buffers + out (lane-padded to 128) x2.
    per_row = (2 * 128 + 2 * 128) * 4
    tb = _choose_batch_tile(Bp, per_row, budget)
    grid = (pl.cdiv(Bp, tb),)

    cost = pl.CostEstimate(
        flops=2 * B * N,
        transcendentals=0,
        bytes_accessed=(B * N + k * N * k + 1 + B) * 4,
    )

    out = pl.pallas_call(
        _packed_kernel,
        out_shape=jax.ShapeDtypeStruct((Bp, k), x.dtype),
        grid=grid,
        in_specs=[
            # x: batch-tiled, 128-lane dense, double-buffered by default.
            pl.BlockSpec((tb, k * N), lambda i: (i, 0)),
            # block-diagonal weight: tiny, same block every step -> resident.
            pl.BlockSpec((k * N, k), lambda i: (0, 0)),
            # bias: scalar in SMEM.
            pl.BlockSpec(memory_space=pltpu.MemorySpace.SMEM),
        ],
        out_specs=pl.BlockSpec((tb, k), lambda i: (i, 0)),
        compiler_params=pltpu.CompilerParams(
            dimension_semantics=("parallel",),
        ),
        cost_estimate=cost,
    )(xp, w_bd, bias)
    # out[i, c] = y[i*k + c]  -> row-major reshape restores original order.
    return out.reshape(B, 1)


def _forward_gemv(x, weight, bias, budget):
    """General path: (tb, tn) blocks, VPU multiply + lane reduce, K-tiled."""
    B, N = x.shape
    tn = _choose_feature_tile(N, budget)
    # Per batch row: x (lane-padded tn) x2 buffers + out (128) x2 + acc (128).
    per_row = (2 * _lane_pad(tn) + 2 * 128 + 128) * 4
    tb = _choose_batch_tile(B, per_row, budget)
    grid = (pl.cdiv(B, tb), pl.cdiv(N, tn))

    cost = pl.CostEstimate(
        flops=2 * B * N,
        transcendentals=0,
        bytes_accessed=(B * N + N + 1 + B) * 4,
    )

    return pl.pallas_call(
        _gemv_kernel,
        out_shape=jax.ShapeDtypeStruct((B, 1), x.dtype),
        grid=grid,
        in_specs=[
            pl.BlockSpec((tb, tn), lambda i, j: (i, j)),
            pl.BlockSpec((1, tn), lambda i, j: (0, j)),
            pl.BlockSpec(memory_space=pltpu.MemorySpace.SMEM),
        ],
        out_specs=pl.BlockSpec((tb, 1), lambda i, j: (i, 0)),
        scratch_shapes=[pltpu.VMEM((tb, 1), jnp.float32)],
        compiler_params=pltpu.CompilerParams(
            dimension_semantics=("parallel", "arbitrary"),
        ),
        cost_estimate=cost,
    )(x, weight, bias)


@functools.partial(jax.jit, static_argnames=("use_pallas",))
def logistic_regression_forward(x, weight, bias, *, use_pallas=None):
    """x: [B, N] f32; weight: [1, N] f32 (PyTorch layout); bias: [1] f32."""
    B, N = x.shape

    if use_pallas is None:
        # Byte-based gate: only genuinely HBM-bound shapes pay for the
        # custom call; tiny problems go to XLA's fused reduce.
        use_pallas = (B * N * 4) >= (4 << 20)
    if not use_pallas:
        return x @ weight.T + bias

    budget = _vmem_budget_bytes()

    # Lane-dense packing when N divides 128 and the batch packs evenly.
    # TODO(synk): N that does not divide 128 (e.g. N=24) could be zero-padded
    # to a divisor before packing; it currently takes the general path.
    if N < 128 and 128 % N == 0 and B % (128 // N) == 0:
        return _forward_packed(x, weight, bias, budget)
    return _forward_gemv(x, weight, bias, budget)


# --------------------------------------------------------------------------
# Demo / self-test
# --------------------------------------------------------------------------
if __name__ == "__main__":
    key = jax.random.PRNGKey(0)
    k_w, k_b, k1, k2, k3, k4 = jax.random.split(key, 6)

    def ref(x, w, b):
        return x @ w.T + b

    # --- 1) Packed lane-dense path (N=16 -> 8 rows per 128-lane row) -------
    n_inputs = 16
    bound = 1.0 / (n_inputs ** 0.5)
    weight = jax.random.uniform(k_w, (1, n_inputs), jnp.float32, -bound, bound)
    bias = jax.random.uniform(k_b, (1,), jnp.float32, -bound, bound)

    x1 = jax.random.normal(k1, (1024, n_inputs), jnp.float32)
    o1 = logistic_regression_forward(x1, weight, bias, use_pallas=True)
    o1 = jax.block_until_ready(o1)
    assert o1.shape == (1024, 1)
    assert jnp.allclose(o1, ref(x1, weight, bias), atol=1e-5, rtol=1e-5)

    # --- 2) General GEMV path (N multiple of 128, partial last batch block) -
    n2 = 256
    bound2 = 1.0 / (n2 ** 0.5)
    w2 = jax.random.uniform(k2, (1, n2), jnp.float32, -bound2, bound2)
    b2 = jax.random.uniform(k3, (1,), jnp.float32, -bound2, bound2)
    x2 = jax.random.normal(k4, (200, n2), jnp.float32)
    o2 = logistic_regression_forward(x2, w2, b2, use_pallas=True)
    o2 = jax.block_until_ready(o2)
    assert o2.shape == (200, 1)
    assert jnp.allclose(o2, ref(x2, w2, b2), atol=1e-4, rtol=1e-4)

    # --- 3) Tiny batch -> byte-gated XLA fallback (same semantics) ----------
    x3 = jax.random.normal(k1, (8, n_inputs), jnp.float32)
    o3 = logistic_regression_forward(x3, weight, bias)
    o3 = jax.block_until_ready(o3)
    assert o3.shape == (8, 1)
    assert jnp.allclose(o3, ref(x3, weight, bias), atol=1e-5, rtol=1e-5)

    print("KERNEL_OK")
</pallas_src>

<mosaic_0001>
module attributes {stable_mosaic.version = 11 : i64} {
  func.func @_packed_kernel(%arg0: i32, %arg1: memref<32x128xf32, #tpu.memory_space<vmem>>, %arg2: memref<128x8xf32, #tpu.memory_space<vmem>>, %arg3: memref<1xf32, #tpu.memory_space<smem>>, %arg4: memref<32x8xf32, #tpu.memory_space<vmem>>) attributes {dimension_semantics = [#tpu.dimension_semantics<parallel>], iteration_bounds = array<i64: 4>, scalar_prefetch = 0 : i64, scratch_operands = 0 : i64, tpu.core_type = #tpu.core_type<tc>, window_params = [{transform_indices = @transform_0, window_bounds = array<i64: 32, 128>}, {pipeline_mode = #tpu.pipeline_mode<synchronous>, transform_indices = @transform_1, window_bounds = array<i64: 128, 8>}, {transform_indices = @transform_2, window_bounds = array<i64: 1>}, {transform_indices = @transform_3, window_bounds = array<i64: 32, 8>}]} {
    %c0 = arith.constant 0 : index
    %c0_0 = arith.constant 0 : index
    %0 = vector.load %arg1[%c0, %c0_0] : memref<32x128xf32, #tpu.memory_space<vmem>>, vector<32x128xf32>
    %c0_1 = arith.constant 0 : index
    %c0_2 = arith.constant 0 : index
    %1 = vector.load %arg2[%c0_1, %c0_2] : memref<128x8xf32, #tpu.memory_space<vmem>>, vector<128x8xf32>
    %cst = arith.constant dense<0.000000e+00> : vector<32x8xf32>
    %2 = tpu.matmul %0, %1, %cst {dimension_numbers = #tpu.dot_dimension_numbers<[1], [0], [0], [1], [0, 0, 1, 1], [], []>} : vector<32x128xf32>, vector<128x8xf32>, vector<32x8xf32> -> vector<32x8xf32>
    %c0_3 = arith.constant 0 : index
    %3 = memref.load %arg3[%c0_3] : memref<1xf32, #tpu.memory_space<smem>>
    %4 = vector.broadcast %3 : f32 to vector<32x8xf32>
    %5 = arith.addf %2, %4 : vector<32x8xf32>
    %c0_4 = arith.constant 0 : index
    %c0_5 = arith.constant 0 : index
    %6 = vector.load %arg4[%c0_4, %c0_5] : memref<32x8xf32, #tpu.memory_space<vmem>>, vector<32x8xf32>
    tpu.vector_store %arg4[%c0_4, %c0_5], %5 {strides = array<i32>} : memref<32x8xf32, #tpu.memory_space<vmem>>, vector<32x8xf32>,
    return
  }
  func.func @transform_0(%arg0: i32) -> (i32, i32) {
    %c0_i32 = arith.constant 0 : i32
    %c0_i32_0 = arith.constant 0 : i32
    return %arg0, %c0_i32 : i32, i32
  }
  func.func @transform_1(%arg0: i32) -> (i32, i32) {
    %c0_i32 = arith.constant 0 : i32
    %c0_i32_0 = arith.constant 0 : i32
    %c0_i32_1 = arith.constant 0 : i32
    return %c0_i32, %c0_i32_0 : i32, i32
  }
  func.func @transform_2(%arg0: i32) -> i32 {
    %c0_i32 = arith.constant 0 : i32
    %c0_i32_0 = arith.constant 0 : i32
    return %c0_i32 : i32
  }
  func.func @transform_3(%arg0: i32) -> (i32, i32) {
    %c0_i32 = arith.constant 0 : i32
    %c0_i32_0 = arith.constant 0 : i32
    return %arg0, %c0_i32 : i32, i32
  }
}

</mosaic_0001>

<llo_original>
// kernel: logistic_regression_forward.1
$region0: #{logistic_regression_forward.1}
  #allocation0 [shape = 'u32[]', space=smem, size = 0x4, offset = 0x4, fixed_abs, tag = 'smem constant byte address 0x4 - core index']
  #allocation1 [shape = 'u32[144,128]{1,0:T(1,128)}', space=vmem, size = 0x12000, scoped, tag = 'internal scratch']
  #allocation2 [shape = 'f32[1]{0:T(128)S(6)}', space=smem, size = 0x200, scoped, tag = 'scoped memory for logistic_regression_forward.1']
  %s0 = inlined_call_operand.vmem [shape: f32[128,128], index: 0, kind: input, shape index: {}]
  %s1 = inlined_call_operand.vmem [shape: f32[128,8], index: 1, kind: input, shape index: {}]
  %s2 = inlined_call_operand.<no memory space> [shape: f32[1], index: 2, kind: input, shape index: {}]
  %s3 = inlined_call_operand.vmem [shape: f32[128,8], index: 3, kind: output, shape index: {}]
  %s4 = sld [smem:[#allocation0]]
  $region45: #{logistic_regression_forward.1} parent=0
    _
  %s6 = ssub.s32 1, %s4
  %s7 = scalar_select 0, %s6, %s4
  %8 = sst [smem:[#allocation2]] %s2
  loop: start=0, step=1, limit=6
  $region2: #{logistic_regression_forward.1} parent=0 // loop_pre_header
    _
  $region3: #{logistic_regression_forward.1} parent=0 // loop_header
    %s10 = sphi 0, %s14
    %p11 = scmp.ge.s32.totalorder %s10, 6
    %s20 = sphi 0, %s22
    %s23 = sphi 0, %s20
    %s24 = sphi 0, %s23
    %s40 = sphi 0, %s24
    %s44 = sphi 0, %s44
    %s46 = sphi 0, %s44
    %s47 = sphi 0, %s46
    %s61 = sphi 0, %s47
    %s65 = sphi 0, %s65
    %s67 = sphi 0, %s65
    %s68 = sphi 0, %s67
    %s82 = sphi 0, %s68
    %s88 = sphi 0, %s90
    %s91 = sphi 0, %s88
    %s92 = sphi 0, %s91
    %s108 = sphi 0, %s92
  $region4: #{logistic_regression_forward.1} parent=0 // loop_header_branch
    %13 = sbr.rel (%p11) target = $region8
  $region5: #{logistic_regression_forward.1} parent=0 // loop_body
    %s15 = ssub.s32 %s10, 1
    %s16 = ssub.s32 %s10, 2
    %s17 = sadd.s32 %s10, 1
    %s18 = ssub.s32 %s10, %s17
    %p19 = scmp.eq.s32.totalorder %s18, 0
    %s21 = sadd.s32 %s20, 1
    %s22 = scalar_select %p19, %s20, %s21
    %p25 = pneg %p19
    %p26 = scmp.eq.s32.totalorder %s10, 3
    %p27 = por %p25, %p26
    %p28 = scmp.ne.s32.totalorder %s20, %s23
    %p29 = scmp.eq.s32.totalorder %s10, 0
    %p30 = por %p28, %p29
    %p31 = scmp.ne.s32.totalorder %s20, %s23
    %p32 = scmp.eq.s32.totalorder %s15, 3
    %p33 = por %p31, %p32
    %p34 = scmp.ne.s32.totalorder %s23, %s24
    %p35 = scmp.eq.s32.totalorder %s15, 0
    %p36 = por %p34, %p35
    %p37 = scmp.ne.s32.totalorder %s23, %s24
    %p38 = scmp.eq.s32.totalorder %s16, 3
    %p39 = por %p37, %p38
    %p41 = scmp.ne.s32.totalorder %s24, %s40
    %p42 = scmp.eq.s32.totalorder %s16, 0
    %p43 = por %p41, %p42
    %s45 = sadd.s32 %s44, 1
    %p48 = scmp.eq.s32.totalorder %s10, 3
    %p49 = scmp.ne.s32.totalorder %s44, %s46
    %p50 = scmp.eq.s32.totalorder %s10, 0
    %p51 = por %p49, %p50
    %p52 = scmp.ne.s32.totalorder %s44, %s46
    %p53 = scmp.eq.s32.totalorder %s15, 3
    %p54 = por %p52, %p53
    %p55 = scmp.ne.s32.totalorder %s46, %s47
    %p56 = scmp.eq.s32.totalorder %s15, 0
    %p57 = por %p55, %p56
    %p58 = scmp.ne.s32.totalorder %s46, %s47
    %p59 = scmp.eq.s32.totalorder %s16, 3
    %p60 = por %p58, %p59
    %p62 = scmp.ne.s32.totalorder %s47, %s61
    %p63 = scmp.eq.s32.totalorder %s16, 0
    %p64 = por %p62, %p63
    %s66 = sadd.s32 %s65, 1
    %p69 = scmp.eq.s32.totalorder %s10, 3
    %p70 = scmp.ne.s32.totalorder %s65, %s67
    %p71 = scmp.eq.s32.totalorder %s10, 0
    %p72 = por %p70, %p71
    %p73 = scmp.ne.s32.totalorder %s65, %s67
    %p74 = scmp.eq.s32.totalorder %s15, 3
    %p75 = por %p73, %p74
    %p76 = scmp.ne.s32.totalorder %s67, %s68
    %p77 = scmp.eq.s32.totalorder %s15, 0
    %p78 = por %p76, %p77
    %p79 = scmp.ne.s32.totalorder %s67, %s68
    %p80 = scmp.eq.s32.totalorder %s16, 3
    %p81 = por %p79, %p80
    %p83 = scmp.ne.s32.totalorder %s68, %s82
    %p84 = scmp.eq.s32.totalorder %s16, 0
    %p85 = por %p83, %p84
    %s86 = ssub.s32 %s10, %s17
    %p87 = scmp.eq.s32.totalorder %s86, 0
    %s89 = sadd.s32 %s88, 1
    %s90 = scalar_select %p87, %s88, %s89
    %p93 = pneg %p87
    %p94 = scmp.eq.s32.totalorder %s10, 3
    %p95 = por %p93, %p94
    %p96 = scmp.ne.s32.totalorder %s88, %s91
    %p97 = scmp.eq.s32.totalorder %s10, 0
    %p98 = por %p96, %p97
    %p99 = scmp.ne.s32.totalorder %s88, %s91
    %p100 = scmp.eq.s32.totalorder %s15, 3
    %p101 = por %p99, %p100
    %p102 = scmp.ne.s32.totalorder %s91, %s92
    %p103 = scmp.eq.s32.totalorder %s15, 0
    %p104 = por %p102, %p103
    %p105 = scmp.ne.s32.totalorder %s91, %s92
    %p106 = scmp.eq.s32.totalorder %s16, 3
    %p107 = por %p105, %p106
    %p109 = scmp.ne.s32.totalorder %s92, %s108
    %p110 = scmp.eq.s32.totalorder %s16, 0
    %p111 = por %p109, %p110
    %p112 = scmp.le.s32.totalorder 1, %s10
    %p113 = scmp.lt.s32.totalorder %s10, 5
    %p114 = pnand %p112, %p113
    %p115 = pneg %p114
    // Predicated region
    $region9: #{logistic_regression_forward.1} parent=5 // pred_check
      _
    $region10: #{logistic_regression_forward.1} parent=5 // pred_check_branch
      %117 = sbr.rel (%p114) target = $region12
    $region11: #{logistic_regression_forward.1} parent=5 // pred_region
      %s118 = ssub.s32 %s10, 1
      // Predicated region
      $region13: #{logistic_regression_forward.1} parent=11 // pred_check
        %p119 = pneg %p57
      $region14: #{logistic_regression_forward.1} parent=11 // pred_check_branch
        %121 = sbr.rel (%p119) target = $region16
      $region15: #{logistic_regression_forward.1} parent=11 // pred_region
        _
      $region16: #{logistic_regression_forward.1} parent=11 // pred_fallthru
        _
      // Predicated region
      $region17: #{logistic_regression_forward.1} parent=11 // pred_check
        %p122 = pneg %p78
      $region18: #{logistic_regression_forward.1} parent=11 // pred_check_branch
        %124 = sbr.rel (%p122) target = $region20
      $region19: #{logistic_regression_forward.1} parent=11 // pred_region
        _
      $region20: #{logistic_regression_forward.1} parent=11 // pred_fallthru
        _
    $region12: #{logistic_regression_forward.1} parent=5 // pred_fallthru
      _
    %p125 = scmp.lt.s32.totalorder %s10, 4
    // Predicated region
    $region21: #{logistic_regression_forward.1} parent=5 // pred_check
      %p126 = pneg %p125
    $region22: #{logistic_regression_forward.1} parent=5 // pred_check_branch
      %128 = sbr.rel (%p126) target = $region24
    $region23: #{logistic_regression_forward.1} parent=5 // pred_region
      // Predicated region
      $region25: #{logistic_regression_forward.1} parent=23 // pred_check
        %p129 = pneg %p30
      $region26: #{logistic_regression_forward.1} parent=23 // pred_check_branch
        %131 = sbr.rel (%p129) target = $region28
      $region27: #{logistic_regression_forward.1} parent=23 // pred_region
        %s132 = smul.u32 4, %s10
        %p133 = scmp.lt.s32.totalorder %s132, 15
        %s134 = scalar_select %p133, %s132, 15
        %s135 = smul.addr %s134, 8
        %s136 = scalar_lea.vmem %s0, %s135
        %s137 = smul.u32 4, %s10
      $region28: #{logistic_regression_forward.1} parent=23 // pred_fallthru
        _
    $region24: #{logistic_regression_forward.1} parent=5 // pred_fallthru
      _
    %p138 = scmp.le.s32.totalorder 1, %s10
    %p139 = scmp.lt.s32.totalorder %s10, 5
    %p140 = pnand %p138, %p139
    %p141 = pneg %p140
    // Predicated region
    $region29: #{logistic_regression_forward.1} parent=5 // pred_check
      _
    $region30: #{logistic_regression_forward.1} parent=5 // pred_check_branch
      %143 = sbr.rel (%p140) target = $region32
    $region31: #{logistic_regression_forward.1} parent=5 // pred_region
      %s144 = ssub.s32 %s10, 1
      %s145 = smul.u32 4, %s15
      %p146 = scmp.lt.s32.totalorder %s145, 15
      %s147 = scalar_select %p146, %s145, 15
      %s148 = smul.addr %s147, 8
      %s149 = scalar_lea.vmem %s0, %s148
      %p150 = pneg %p36
      %p151 = pneg %p33
      %p152 = pneg %p57
      %p153 = pneg %p54
      %p154 = pneg %p78
      %p155 = pneg %p75
      %p156 = pneg %p104
      %p157 = pneg %p101
      %s158 = smul.u32 4, %s15
      %p159 = scmp.lt.s32.totalorder %s158, 15
      %s160 = scalar_select %p159, %s158, 15
      %s161 = smul.addr %s160, 8
      %s162 = scalar_lea.vmem %s3, %s161
      %s163 = smul.u32 4, %s15
      %p164 = scmp.lt.s32.totalorder %s163, 15
      %s165 = scalar_select %p164, %s163, 15
      %s166 = smul.addr %s165, 8
      %s167 = scalar_lea.vmem %s0, %s166
      %s168 = smul.u32 4, %s15
      %s169 = smul.u32 4, %s15
      %p170 = scmp.lt.s32.totalorder %s169, 15
      %s171 = scalar_select %p170, %s169, 15
      %s172 = smul.addr %s171, 8
      %s173 = scalar_lea.vmem %s3, %s172
      %s174 = smul.u32 4, %s15
      %v175 = vld [vmem:[%s167] sm:$0xff]
      %v176 = vld [vmem:[%s167 + $0x8] sm:$0xff]
      %v177 = vld [vmem:[%s167 + $0x10] sm:$0xff]
      %v178 = vld [vmem:[%s167 + $0x18] sm:$0xff]
      %v179 = vld [vmem:[%s1] sm:$0xff]
      %v180 = vld [vmem:[%s1 + $0x8] sm:$0xff]
      %v181 = vld [vmem:[%s1 + $0x10] sm:$0xff]
      %v182 = vld [vmem:[%s1 + $0x18] sm:$0xff]
      %v183 = vld [vmem:[%s1 + $0x20] sm:$0xff]
      %v184 = vld [vmem:[%s1 + $0x28] sm:$0xff]
      %v185 = vld [vmem:[%s1 + $0x30] sm:$0xff]
      %v186 = vld [vmem:[%s1 + $0x38] sm:$0xff]
      %v187 = vld [vmem:[%s1 + $0x40] sm:$0xff]
      %v188 = vld [vmem:[%s1 + $0x48] sm:$0xff]
      %v189 = vld [vmem:[%s1 + $0x50] sm:$0xff]
      %v190 = vld [vmem:[%s1 + $0x58] sm:$0xff]
      %v191 = vld [vmem:[%s1 + $0x60] sm:$0xff]
      %v192 = vld [vmem:[%s1 + $0x68] sm:$0xff]
      %v193 = vld [vmem:[%s1 + $0x70] sm:$0xff]
      %v194 = vld [vmem:[%s1 + $0x78] sm:$0xff]
      %s195 = sld [smem:[#allocation2]]
      %v196 = vstv %s195
      %197 = vmatprep.subr.mxu0 0.0
      %198 = vmatpush1.msra.mxu0 %v179
      %199 = vmatprep.subr.mxu0 0.0
      %200 = vmatpush1.msra.mxu0 %v180
      %201 = vmatprep.subr.mxu0 0.0
      %202 = vmatpush1.msra.mxu0 %v181
      %203 = vmatprep.subr.mxu0 0.0
      %204 = vmatpush1.msra.mxu0 %v182
      %205 = vmatprep.subr.mxu0 0.0
      %206 = vmatpush1.msra.mxu0 %v183
      %207 = vmatprep.subr.mxu0 0.0
      %208 = vmatpush1.msra.mxu0 %v184
      %209 = vmatprep.subr.mxu0 0.0
      %210 = vmatpush1.msra.mxu0 %v185
      %211 = vmatprep.subr.mxu0 0.0
      %212 = vmatpush1.msra.mxu0 %v186
      %213 = vmatprep.subr.mxu0 0.0
      %214 = vmatpush1.msra.mxu0 %v187
      %215 = vmatprep.subr.mxu0 0.0
      %216 = vmatpush1.msra.mxu0 %v188
      %217 = vmatprep.subr.mxu0 0.0
      %218 = vmatpush1.msra.mxu0 %v189
      %219 = vmatprep.subr.mxu0 0.0
      %220 = vmatpush1.msra.mxu0 %v190
      %221 = vmatprep.subr.mxu0 0.0
      %222 = vmatpush1.msra.mxu0 %v191
      %223 = vmatprep.subr.mxu0 0.0
      %224 = vmatpush1.msra.mxu0 %v192
      %225 = vmatprep.subr.mxu0 0.0
      %226 = vmatpush1.msra.mxu0 %v193
      %227 = vmatprep.subr.mxu0 0.0
      %228 = vmatpush1.msra.mxu0 %v194
      %229 = vmatprep.subr.mxu0 0.0
      %230 = vmatpush1.msra.mxu0 0.0
      %231 = vmatprep.subr.mxu0 0.0
      %232 = vmatpush1.msra.mxu0 0.0
      %233 = vmatprep.subr.mxu0 0.0
      %234 = vmatpush1.msra.mxu0 0.0
      %235 = vmatprep.subr.mxu0 0.0
      %236 = vmatpush1.msra.mxu0 0.0
      %237 = vmatprep.subr.mxu0 0.0
      %238 = vmatpush1.msra.mxu0 0.0
      %239 = vmatprep.subr.mxu0 0.0
      %240 = vmatpush1.msra.mxu0 0.0
      %241 = vmatprep.subr.mxu0 0.0
      %242 = vmatpush1.msra.mxu0 0.0
      %243 = vmatprep.subr.mxu0 0.0
      %244 = vmatpush1.msra.mxu0 0.0
      %245 = vmatprep.subr.mxu0 0.0
      %246 = vmatpush1.msra.mxu0 0.0
      %247 = vmatprep.subr.mxu0 0.0
      %248 = vmatpush1.msra.mxu0 0.0
      %249 = vmatprep.subr.mxu0 0.0
      %250 = vmatpush1.msra.mxu0 0.0
      %251 = vmatprep.subr.mxu0 0.0
      %252 = vmatpush1.msra.mxu0 0.0
      %253 = vmatprep.subr.mxu0 0.0
      %254 = vmatpush1.msra.mxu0 0.0
      %255 = vmatprep.subr.mxu0 0.0
      %256 = vmatpush1.msra.mxu0 0.0
      %257 = vmatprep.subr.mxu0 0.0
      %258 = vmatpush1.msra.mxu0 0.0
      %259 = vmatprep.subr.mxu0 0.0
      %260 = vmatpush1.msra.mxu0 0.0
      %261 = vmatprep.mubr.f32.mxu0 0.0
      %262 = vmatmul.mubr.f32.gmra.mrb[0].mxu0 %v175
      %v263 = vpop.f32.mrb[0].mxu0
      %v264 = vadd.f32 %v196, %v263
      %v265 = vpop.f32.mrb[0].mxu0
      %266 = vmatprep.mubr.f32.mxu0 0.0
      %267 = vmatmul.mubr.f32.gmra.mrb[0].mxu0 %v176
      %v268 = vpop.f32.mrb[0].mxu0
      %v269 = vadd.f32 %v196, %v268
      %v270 = vpop.f32.mrb[0].mxu0
      %271 = vmatprep.mubr.f32.mxu0 0.0
      %272 = vmatmul.mubr.f32.gmra.mrb[0].mxu0 %v177
      %v273 = vpop.f32.mrb[0].mxu0
      %v274 = vadd.f32 %v196, %v273
      %v275 = vpop.f32.mrb[0].mxu0
      %276 = vmatprep.mubr.f32.mxu0 0.0
      %277 = vmatmul.mubr.f32.gmra.mrb[0].mxu0 %v178
      %v278 = vpop.f32.mrb[0].mxu0
      %v279 = vadd.f32 %v196, %v278
      %v280 = vpop.f32.mrb[0].mxu0
      %281 = vdwg.mxu0
      %vm282 = vcmask 64512
      %283 = vst.msk [vmem:[%s173] sm:$0xff] %vm282, %v264
      %284 = vst.msk [vmem:[%s173 + $0x8] sm:$0xff] %vm282, %v269
      %285 = vst.msk [vmem:[%s173 + $0x10] sm:$0xff] %vm282, %v274
      %286 = vst.msk [vmem:[%s173 + $0x18] sm:$0xff] %vm282, %v279
      %s287 = smul.u32 4, %s15
      %p288 = scmp.lt.s32.totalorder %s287, 15
      %s289 = scalar_select %p288, %s287, 15
      %s290 = smul.addr %s289, 8
      %s291 = scalar_lea.vmem %s3, %s290
      // Predicated region
      $region33: #{logistic_regression_forward.1} parent=31 // pred_check
        %p292 = pneg %p101
      $region34: #{logistic_regression_forward.1} parent=31 // pred_check_branch
        %294 = sbr.rel (%p292) target = $region36
      $region35: #{logistic_regression_forward.1} parent=31 // pred_region
        %s295 = smul.u32 4, %s15
      $region36: #{logistic_regression_forward.1} parent=31 // pred_fallthru
        _
    $region32: #{logistic_regression_forward.1} parent=5 // pred_fallthru
      _
    %p296 = scmp.le.s32.totalorder 2, %s10
    // Predicated region
    $region37: #{logistic_regression_forward.1} parent=5 // pred_check
      %p297 = pneg %p296
    $region38: #{logistic_regression_forward.1} parent=5 // pred_check_branch
      %299 = sbr.rel (%p297) target = $region40
    $region39: #{logistic_regression_forward.1} parent=5 // pred_region
      %s300 = ssub.s32 %s10, 2
      // Predicated region
      $region41: #{logistic_regression_forward.1} parent=39 // pred_check
        %p301 = pneg %p107
      $region42: #{logistic_regression_forward.1} parent=39 // pred_check_branch
        %303 = sbr.rel (%p301) target = $region44
      $region43: #{logistic_regression_forward.1} parent=39 // pred_region
        %s304 = smul.u32 4, %s16
        %p305 = scmp.lt.s32.totalorder %s304, 15
        %s306 = scalar_select %p305, %s304, 15
        %s307 = smul.addr %s306, 8
        %s308 = scalar_lea.vmem %s3, %s307
      $region44: #{logistic_regression_forward.1} parent=39 // pred_fallthru
        _
    $region40: #{logistic_regression_forward.1} parent=5 // pred_fallthru
      _
  $region6: #{logistic_regression_forward.1} parent=0 // loop_footer
    %s14 = sadd.s32 1, %s10
  $region7: #{logistic_regression_forward.1} parent=0 // loop_footer_branch
    %9 = sbr.rel target = $region3
  $region8: #{logistic_regression_forward.1} parent=0 // loop_exit
    _

</llo_original>
